<compile_context>
chip_gen: v5e
topology: v5e:2x2
jax: 0.10.0
libtpu: 0.0.40
codegen_flags: <defaults>
</compile_context>

<pallas_src>
from functools import partial
from typing import NamedTuple

import jax
import jax.numpy as jnp
from jax.experimental import pallas as pl
from jax.experimental.pallas import tpu as pltpu


def mlp_kernel(x_ref, w1_ref, b1_ref, w2_ref, b2_ref, o_ref):
    # x arrives as f32 straight from HBM; cast to bf16 here (free on the VPU
    # relative to the saved HBM pass), matmuls accumulate in f32 on the MXU,
    # bias adds + ReLU stay in f32.
    x_bf = x_ref[...].astype(jnp.bfloat16)
    h = jnp.dot(x_bf, w1_ref[...], preferred_element_type=jnp.float32)
    h = jnp.maximum(h + b1_ref[...], 0.0)
    out = jnp.dot(h.astype(jnp.bfloat16), w2_ref[...],
                  preferred_element_type=jnp.float32) + b2_ref[...]
    o_ref[...] = out.astype(o_ref.dtype)


def _round_up(x, m):
    return ((x + m - 1) // m) * m


class NetParams(NamedTuple):
    """Pre-processed (hoisted) parameters: bf16 weights, padded classifier."""
    w1_bf: jax.Array    # (784, 256) bf16
    b1_2d: jax.Array    # (1, 256)   f32
    w2_bf: jax.Array    # (256, C_pad) bf16, zero-padded columns
    b2_2d: jax.Array    # (1, C_pad)   f32, zero-padded
    num_classes: int
    c_pad: int


def prepare_params(w1, b1, w2, b2):
    """Hoist weight prep out of the per-call path (do this once, reuse)."""
    d_in, hidden = w1.shape
    _, num_classes = w2.shape
    c_pad = _round_up(max(num_classes, 128), 128)   # lane-dense output tile
    w1_bf = w1.astype(jnp.bfloat16)
    w2_bf = jnp.pad(w2, ((0, 0), (0, c_pad - num_classes))).astype(jnp.bfloat16)
    b1_2d = b1.reshape(1, hidden).astype(jnp.float32)
    b2_2d = jnp.pad(b2, (0, c_pad - num_classes)).reshape(1, c_pad).astype(jnp.float32)
    return NetParams(w1_bf, b1_2d, w2_bf, b2_2d, num_classes, c_pad)


def _small_batch_forward(x_flat, p: NetParams):
    """Tiny-batch fast path: plain XLA dots, same bf16-input / f32-accum math."""
    h = jnp.dot(x_flat.astype(jnp.bfloat16), p.w1_bf,
                preferred_element_type=jnp.float32) + p.b1_2d
    h = jnp.maximum(h, 0.0)
    out = jnp.dot(h.astype(jnp.bfloat16), p.w2_bf,
                  preferred_element_type=jnp.float32) + p.b2_2d
    return out[:, :p.num_classes]


def net_forward(x, params: NetParams, *, tm=1024, small_batch_threshold=64,
                force_pallas=False):
    """x: (B, 1, 28, 28) or (B, 784) float32.  Returns (B, num_classes) f32."""
    B = x.shape[0]
    x_flat = x.reshape(B, -1).astype(jnp.float32)               # torch .view
    d_in = x_flat.shape[1]
    hidden = params.w1_bf.shape[1]
    c_pad = params.c_pad

    # Latency fast path: at tiny B the pallas_call mostly moves weights around.
    if (B <= small_batch_threshold) and not force_pallas:
        return _small_batch_forward(x_flat, params)

    # ---- Batch tile selection ---------------------------------------------
    # TM multiple of 16 (bf16 sublane packing of the casted x / h tiles).
    TM = min(tm, _round_up(B, 16))
    TM = max(16, (TM // 16) * 16)
    # Keep >= 2 grid steps when the batch allows, so the ("parallel",) axis
    # can be sharded across both v7x TensorCores.
    if B >= 32 and _round_up(B, TM) == TM:
        TM = max(16, _round_up((B + 1) // 2, 16))
    B_pad = _round_up(B, TM)

    if B_pad != B:
        # f32 pad of the ragged tail only (no dtype-conversion pass on x).
        x_flat = jnp.pad(x_flat, ((0, B_pad - B), (0, 0)))

    grid = (B_pad // TM,)

    out = pl.pallas_call(
        mlp_kernel,
        out_shape=jax.ShapeDtypeStruct((B_pad, c_pad), jnp.float32),
        grid=grid,
        in_specs=[
            # x: tiled over the batch, f32 straight from HBM
            pl.BlockSpec((TM, d_in), lambda i: (i, 0)),
            # weights / biases: resident across all grid steps
            pl.BlockSpec((d_in, hidden), lambda i: (0, 0)),
            pl.BlockSpec((1, hidden), lambda i: (0, 0)),
            pl.BlockSpec((hidden, c_pad), lambda i: (0, 0)),
            pl.BlockSpec((1, c_pad), lambda i: (0, 0)),
        ],
        out_specs=pl.BlockSpec((TM, c_pad), lambda i: (i, 0)),
        compiler_params=pltpu.CompilerParams(
            dimension_semantics=("parallel",),
            vmem_limit_bytes=32 << 20,
        ),
    )(x_flat, params.w1_bf, params.b1_2d, params.w2_bf, params.b2_2d)

    return out[:B, :params.num_classes]


def init_params(key, num_classes=10):
    """Deterministic init mimicking nn.Linear default (uniform +- 1/sqrt(fan_in)).
    Weights stored as (in_features, out_features) = transpose of torch layout."""
    k1, k2, k3, k4 = jax.random.split(key, 4)
    bound1 = 1.0 / jnp.sqrt(784.0)
    bound2 = 1.0 / jnp.sqrt(256.0)
    w1 = jax.random.uniform(k1, (784, 256), jnp.float32, -bound1, bound1)
    b1 = jax.random.uniform(k2, (256,), jnp.float32, -bound1, bound1)
    w2 = jax.random.uniform(k3, (256, num_classes), jnp.float32, -bound2, bound2)
    b2 = jax.random.uniform(k4, (num_classes,), jnp.float32, -bound2, bound2)
    return w1, b1, w2, b2


def _reference(x, w1, b1, w2, b2):
    """Plain-JAX reference matching the kernel's bf16-input / f32-accum math."""
    B = x.shape[0]
    x_flat = x.reshape(B, -1)
    h = jnp.dot(x_flat.astype(jnp.bfloat16), w1.astype(jnp.bfloat16),
                preferred_element_type=jnp.float32) + b1
    h = jnp.maximum(h, 0.0)
    return jnp.dot(h.astype(jnp.bfloat16), w2.astype(jnp.bfloat16),
                   preferred_element_type=jnp.float32) + b2


if __name__ == "__main__":
    key = jax.random.PRNGKey(0)
    kx, kp = jax.random.split(key)
    num_classes = 10
    B = 2
    x = jax.random.normal(kx, (B, 1, 28, 28), jnp.float32)      # NCHW -> 784
    w1, b1, w2, b2 = init_params(kp, num_classes)

    params = prepare_params(w1, b1, w2, b2)                     # hoisted once

    # Exercise the Pallas kernel explicitly (small B would otherwise take the
    # XLA fast path).
    out = net_forward(x, params, force_pallas=True)
    out = jax.block_until_ready(out)
    ref = _reference(x, w1, b1, w2, b2)
    assert out.shape == (B, num_classes)
    assert jnp.allclose(out, ref, atol=1e-2, rtol=1e-2), (
        f"max abs diff {jnp.max(jnp.abs(out - ref))}")

    # Also sanity-check the small-batch fast path and a ragged multi-tile batch.
    out_fast = jax.block_until_ready(net_forward(x, params))
    assert jnp.allclose(out_fast, ref, atol=1e-2, rtol=1e-2)

    B2 = 200                                                    # ragged, 2+ tiles
    x2 = jax.random.normal(jax.random.PRNGKey(1), (B2, 1, 28, 28), jnp.float32)
    out2 = jax.block_until_ready(net_forward(x2, params, tm=64))
    ref2 = _reference(x2, w1, b1, w2, b2)
    assert out2.shape == (B2, num_classes)
    assert jnp.allclose(out2, ref2, atol=1e-2, rtol=1e-2), (
        f"max abs diff {jnp.max(jnp.abs(out2 - ref2))}")

    print("KERNEL_OK")
</pallas_src>

<mosaic_0001>
module attributes {stable_mosaic.version = 11 : i64} {
  func.func @mlp_kernel(%arg0: i32, %arg1: memref<16x784xf32, #tpu.memory_space<vmem>>, %arg2: memref<784x256xbf16, #tpu.memory_space<vmem>>, %arg3: memref<1x256xf32, #tpu.memory_space<vmem>>, %arg4: memref<256x128xbf16, #tpu.memory_space<vmem>>, %arg5: memref<1x128xf32, #tpu.memory_space<vmem>>, %arg6: memref<16x128xf32, #tpu.memory_space<vmem>>) attributes {dimension_semantics = [#tpu.dimension_semantics<parallel>], iteration_bounds = array<i64: 1>, scalar_prefetch = 0 : i64, scratch_operands = 0 : i64, tpu.core_type = #tpu.core_type<tc>, window_params = [{transform_indices = @transform_0, window_bounds = array<i64: 16, 784>}, {pipeline_mode = #tpu.pipeline_mode<synchronous>, transform_indices = @transform_1, window_bounds = array<i64: 784, 256>}, {pipeline_mode = #tpu.pipeline_mode<synchronous>, transform_indices = @transform_2, window_bounds = array<i64: 1, 256>}, {pipeline_mode = #tpu.pipeline_mode<synchronous>, transform_indices = @transform_3, window_bounds = array<i64: 256, 128>}, {pipeline_mode = #tpu.pipeline_mode<synchronous>, transform_indices = @transform_4, window_bounds = array<i64: 1, 128>}, {transform_indices = @transform_5, window_bounds = array<i64: 16, 128>}]} {
    %c0 = arith.constant 0 : index
    %c0_0 = arith.constant 0 : index
    %0 = vector.load %arg1[%c0, %c0_0] : memref<16x784xf32, #tpu.memory_space<vmem>>, vector<16x784xf32>
    %1 = arith.truncf %0 : vector<16x784xf32> to vector<16x784xbf16>
    %c0_1 = arith.constant 0 : index
    %c0_2 = arith.constant 0 : index
    %2 = vector.load %arg2[%c0_1, %c0_2] : memref<784x256xbf16, #tpu.memory_space<vmem>>, vector<784x256xbf16>
    %cst = arith.constant dense<0.000000e+00> : vector<16x256xf32>
    %3 = tpu.matmul %1, %2, %cst {dimension_numbers = #tpu.dot_dimension_numbers<[1], [0], [0], [1], [0, 0, 1, 1], [], []>} : vector<16x784xbf16>, vector<784x256xbf16>, vector<16x256xf32> -> vector<16x256xf32>
    %c0_3 = arith.constant 0 : index
    %c0_4 = arith.constant 0 : index
    %4 = vector.load %arg3[%c0_3, %c0_4] : memref<1x256xf32, #tpu.memory_space<vmem>>, vector<1x256xf32>
    %5 = vector.broadcast %4 : vector<1x256xf32> to vector<16x256xf32>
    %6 = arith.addf %3, %5 : vector<16x256xf32>
    %cst_5 = arith.constant 0.000000e+00 : f32
    %7 = vector.broadcast %cst_5 : f32 to vector<16x256xf32>
    %8 = arith.maximumf %6, %7 : vector<16x256xf32>
    %9 = arith.truncf %8 : vector<16x256xf32> to vector<16x256xbf16>
    %c0_6 = arith.constant 0 : index
    %c0_7 = arith.constant 0 : index
    %10 = vector.load %arg4[%c0_6, %c0_7] : memref<256x128xbf16, #tpu.memory_space<vmem>>, vector<256x128xbf16>
    %cst_8 = arith.constant dense<0.000000e+00> : vector<16x128xf32>
    %11 = tpu.matmul %9, %10, %cst_8 {dimension_numbers = #tpu.dot_dimension_numbers<[1], [0], [0], [1], [0, 0, 1, 1], [], []>} : vector<16x256xbf16>, vector<256x128xbf16>, vector<16x128xf32> -> vector<16x128xf32>
    %c0_9 = arith.constant 0 : index
    %c0_10 = arith.constant 0 : index
    %12 = vector.load %arg5[%c0_9, %c0_10] : memref<1x128xf32, #tpu.memory_space<vmem>>, vector<1x128xf32>
    %13 = vector.broadcast %12 : vector<1x128xf32> to vector<16x128xf32>
    %14 = arith.addf %11, %13 : vector<16x128xf32>
    %c0_11 = arith.constant 0 : index
    %c0_12 = arith.constant 0 : index
    %15 = vector.load %arg6[%c0_11, %c0_12] : memref<16x128xf32, #tpu.memory_space<vmem>>, vector<16x128xf32>
    tpu.vector_store %arg6[%c0_11, %c0_12], %14 {strides = array<i32>} : memref<16x128xf32, #tpu.memory_space<vmem>>, vector<16x128xf32>,
    return
  }
  func.func @transform_0(%arg0: i32) -> (i32, i32) {
    %c0_i32 = arith.constant 0 : i32
    %c0_i32_0 = arith.constant 0 : i32
    return %arg0, %c0_i32 : i32, i32
  }
  func.func @transform_1(%arg0: i32) -> (i32, i32) {
    %c0_i32 = arith.constant 0 : i32
    %c0_i32_0 = arith.constant 0 : i32
    %c0_i32_1 = arith.constant 0 : i32
    return %c0_i32, %c0_i32_0 : i32, i32
  }
  func.func @transform_2(%arg0: i32) -> (i32, i32) {
    %c0_i32 = arith.constant 0 : i32
    %c0_i32_0 = arith.constant 0 : i32
    %c0_i32_1 = arith.constant 0 : i32
    return %c0_i32, %c0_i32_0 : i32, i32
  }
  func.func @transform_3(%arg0: i32) -> (i32, i32) {
    %c0_i32 = arith.constant 0 : i32
    %c0_i32_0 = arith.constant 0 : i32
    %c0_i32_1 = arith.constant 0 : i32
    return %c0_i32, %c0_i32_0 : i32, i32
  }
  func.func @transform_4(%arg0: i32) -> (i32, i32) {
    %c0_i32 = arith.constant 0 : i32
    %c0_i32_0 = arith.constant 0 : i32
    %c0_i32_1 = arith.constant 0 : i32
    return %c0_i32, %c0_i32_0 : i32, i32
  }
  func.func @transform_5(%arg0: i32) -> (i32, i32) {
    %c0_i32 = arith.constant 0 : i32
    %c0_i32_0 = arith.constant 0 : i32
    return %arg0, %c0_i32 : i32, i32
  }
}

</mosaic_0001>

<llo_original>
// kernel: tpu_custom_call.1
$region0: #{tpu_custom_call.1}
  #allocation0 [shape = 'u32[]', space=smem, size = 0x4, offset = 0x4, fixed_abs, tag = 'smem constant byte address 0x4 - core index']
  #allocation1 [shape = 'u32[72,128]{1,0:T(1,128)}', space=vmem, size = 0x9000, scoped, tag = 'internal scratch']
  %s0 = inlined_call_operand.hbm [shape: f32[16,784], index: 0, kind: input, shape index: {}]
  %s1 = inlined_call_operand.hbm [shape: bf16[784,256], index: 1, kind: input, shape index: {}]
  %s2 = inlined_call_operand.hbm [shape: f32[1,256], index: 2, kind: input, shape index: {}]
  %s3 = inlined_call_operand.hbm [shape: bf16[256,128], index: 3, kind: input, shape index: {}]
  %s4 = inlined_call_operand.vmem [shape: f32[1,128], index: 4, kind: input, shape index: {}]
  %s5 = inlined_call_operand.hbm [shape: f32[16,128], index: 5, kind: output, shape index: {}]
  %s6 = sld [smem:[#allocation0]]
  $region46: #{tpu_custom_call.1} parent=0
    _
  %s8 = ssub.s32 1, %s6
  %s9 = scalar_select 0, %s8, %s6
  $region1: #{tpu_custom_call.1} parent=0
    #allocation2 [shape = 'u8[57344]{0}', space=vmem, size = 0xe000, scoped, tag = 'input window, operand 0, single buffered']
    #allocation3 [shape = 's32[1]{0}', space=sflag, size = 0x4, scoped, tag = 'scoped memory for tpu_custom_call.1']
    #allocation4 [shape = 's32[1]{0}', space=sflag, size = 0x4, scoped, tag = 'scoped memory for tpu_custom_call.1']
    #allocation5 [shape = 'u8[401408]{0}', space=vmem, size = 0x62000, scoped, tag = 'input window, operand 1, single buffered']
    #allocation6 [shape = 's32[1]{0}', space=sflag, size = 0x4, scoped, tag = 'scoped memory for tpu_custom_call.1']
    #allocation7 [shape = 'u8[1024]{0}', space=vmem, size = 0x400, scoped, tag = 'input window, operand 2, single buffered']
    #allocation8 [shape = 'u8[65536]{0}', space=vmem, size = 0x10000, scoped, tag = 'input window, operand 3, single buffered']
    #allocation9 [shape = 's32[1]{0}', space=sflag, size = 0x4, scoped, tag = 'scoped memory for tpu_custom_call.1']
    #allocation10 [shape = 'u8[8192]{0}', space=vmem, size = 0x2000, scoped, tag = 'output window, operand 0, single buffered']
    %10 = vsyncpa [#allocation3], 0
    %11 = vsyncpa [#allocation6], 0
    %12 = vsyncpa [#allocation9], 0
    %13 = vsyncpa [#allocation4], 0
    // Predicated region
    $region2: #{tpu_custom_call.1} parent=1 // pred_check
      _
    $region3: #{tpu_custom_call.1} parent=1 // pred_check_branch
      %15 = sbr.rel (0) target = $region5
    $region4: #{tpu_custom_call.1} parent=1 // pred_region
      %17 = vsyncadd [#allocation3], 0
      %s18 = sshll.u32 %s0, 4
      %s19 = int_to_ptr.hbm [resolvable:$true] %s18
      %s20 = sshll.u32 [#allocation2], 4
      %s21 = int_to_ptr.vmem [resolvable:$true] %s20
      %26 = dma.hbm_to_vmem [thread:$0]  %s19, 1792, %s21, [#allocation3], 896, 896, 56
    $region5: #{tpu_custom_call.1} parent=1 // pred_fallthru
      _
    // Predicated region
    $region6: #{tpu_custom_call.1} parent=1 // pred_check
      _
    $region7: #{tpu_custom_call.1} parent=1 // pred_check_branch
      %28 = sbr.rel (0) target = $region9
    $region8: #{tpu_custom_call.1} parent=1 // pred_region
      %30 = vsyncadd [#allocation6], 0
      %s31 = sshll.u32 %s1, 4
      %s32 = int_to_ptr.hbm [resolvable:$true] %s31
      %s33 = sshll.u32 [#allocation5], 4
      %s34 = int_to_ptr.vmem [resolvable:$true] %s33
      %39 = dma.hbm_to_vmem [thread:$0]  %s32, 12544, %s34, [#allocation6], 128, 128, 8
    $region9: #{tpu_custom_call.1} parent=1 // pred_fallthru
      _
    // Predicated region
    $region10: #{tpu_custom_call.1} parent=1 // pred_check
      _
    $region11: #{tpu_custom_call.1} parent=1 // pred_check_branch
      %41 = sbr.rel (0) target = $region13
    $region12: #{tpu_custom_call.1} parent=1 // pred_region
      %43 = vsyncadd [#allocation6], 0
      %s45 = sshll.u32 %s2, 4
      %s46 = int_to_ptr.hbm [resolvable:$true] %s45
      %s47 = sshll.u32 [#allocation7], 4
      %s48 = int_to_ptr.vmem [resolvable:$true] %s47
      %50 = dma.hbm_to_vmem [thread:$0]  %s46, 32, %s48, [#allocation6]
    $region13: #{tpu_custom_call.1} parent=1 // pred_fallthru
      _
    // Predicated region
    $region14: #{tpu_custom_call.1} parent=1 // pred_check
      _
    $region15: #{tpu_custom_call.1} parent=1 // pred_check_branch
      %52 = sbr.rel (0) target = $region17
    $region16: #{tpu_custom_call.1} parent=1 // pred_region
      %54 = vsyncadd [#allocation9], 0
      %s55 = sshll.u32 %s3, 4
      %s56 = int_to_ptr.hbm [resolvable:$true] %s55
      %s57 = sshll.u32 [#allocation8], 4
      %s58 = int_to_ptr.vmem [resolvable:$true] %s57
      %63 = dma.hbm_to_vmem [thread:$0]  %s56, 2048, %s58, [#allocation9], 64, 64, 4
    $region17: #{tpu_custom_call.1} parent=1 // pred_fallthru
      _
    // Predicated region
    $region18: #{tpu_custom_call.1} parent=1 // pred_check
      _
    $region19: #{tpu_custom_call.1} parent=1 // pred_check_branch
      %65 = sbr.rel (0) target = $region21
    $region20: #{tpu_custom_call.1} parent=1 // pred_region
      _
    $region21: #{tpu_custom_call.1} parent=1 // pred_fallthru
      _
    // Predicated region
    $region22: #{tpu_custom_call.1} parent=1 // pred_check
      _
    $region23: #{tpu_custom_call.1} parent=1 // pred_check_branch
      %67 = sbr.rel (0) target = $region25
    $region24: #{tpu_custom_call.1} parent=1 // pred_region
      %69 = dma.done [#allocation3], 1792
    $region25: #{tpu_custom_call.1} parent=1 // pred_fallthru
      _
    // Predicated region
    $region26: #{tpu_custom_call.1} parent=1 // pred_check
      _
    $region27: #{tpu_custom_call.1} parent=1 // pred_check_branch
      %71 = sbr.rel (0) target = $region29
    $region28: #{tpu_custom_call.1} parent=1 // pred_region
      %73 = dma.done [#allocation6], 12544
    $region29: #{tpu_custom_call.1} parent=1 // pred_fallthru
      _
    // Predicated region
    $region30: #{tpu_custom_call.1} parent=1 // pred_check
      _
    $region31: #{tpu_custom_call.1} parent=1 // pred_check_branch
      %75 = sbr.rel (0) target = $region33
    $region32: #{tpu_custom_call.1} parent=1 // pred_region
      %77 = dma.done [#allocation6], 32
    $region33: #{tpu_custom_call.1} parent=1 // pred_fallthru
      _
    // Predicated region
    $region34: #{tpu_custom_call.1} parent=1 // pred_check
      _
    $region35: #{tpu_custom_call.1} parent=1 // pred_check_branch
      %79 = sbr.rel (0) target = $region37
    $region36: #{tpu_custom_call.1} parent=1 // pred_region
      %81 = dma.done [#allocation9], 2048
    $region37: #{tpu_custom_call.1} parent=1 // pred_fallthru
      _
    %v83 = vld [vmem:[#allocation2] sm:$0xff]
    %v84 = vld [vmem:[#allocation2 + $0x8] sm:$0xff]
    %v85 = vld [vmem:[#allocation2 + $0x10] sm:$0xff]
    %v86 = vld [vmem:[#allocation2 + $0x18] sm:$0xff]
    %v87 = vld [vmem:[#allocation2 + $0x20] sm:$0xff]
    %v88 = vld [vmem:[#allocation2 + $0x28] sm:$0xff]
    %v89 = vld [vmem:[#allocation2 + $0x30] sm:$0xff]
    %v90 = vld [vmem:[#allocation2 + $0x38] sm:$0xff]
    %v91 = vld [vmem:[#allocation2 + $0x40] sm:$0xff]
    %v92 = vld [vmem:[#allocation2 + $0x48] sm:$0xff]
    %v93 = vld [vmem:[#allocation2 + $0x50] sm:$0xff]
    %v94 = vld [vmem:[#allocation2 + $0x58] sm:$0xff]
    %v95 = vld [vmem:[#allocation2 + $0x60] sm:$0xff]
    %v96 = vld [vmem:[#allocation2 + $0x68] sm:$0xff]
    %v97 = vpack.c.bf16 %v90, %v83
    %v98 = vpack.c.bf16 %v91, %v84
    %v99 = vpack.c.bf16 %v92, %v85
    %v100 = vpack.c.bf16 %v93, %v86
    %v101 = vpack.c.bf16 %v94, %v87
    %v102 = vpack.c.bf16 %v95, %v88
    %v103 = vpack.c.bf16 %v96, %v89
    %v104 = vld [vmem:[#allocation5] sm:$0xff]
    %v105 = vld [vmem:[#allocation5 + $0x8] sm:$0xff]
    %v106 = vld [vmem:[#allocation5 + $0x10] sm:$0xff]
    %v107 = vld [vmem:[#allocation5 + $0x18] sm:$0xff]
    %v108 = vld [vmem:[#allocation5 + $0x20] sm:$0xff]
    %v109 = vld [vmem:[#allocation5 + $0x28] sm:$0xff]
    %v110 = vld [vmem:[#allocation5 + $0x30] sm:$0xff]
    %v111 = vld [vmem:[#allocation5 + $0x38] sm:$0xff]
    %v112 = vld [vmem:[#allocation5 + $0x40] sm:$0xff]
    %v113 = vld [vmem:[#allocation5 + $0x48] sm:$0xff]
    %v114 = vld [vmem:[#allocation5 + $0x50] sm:$0xff]
    %v115 = vld [vmem:[#allocation5 + $0x58] sm:$0xff]
    %v116 = vld [vmem:[#allocation5 + $0x60] sm:$0xff]
    %v117 = vld [vmem:[#allocation5 + $0x68] sm:$0xff]
    %v118 = vld [vmem:[#allocation5 + $0x70] sm:$0xff]
    %v119 = vld [vmem:[#allocation5 + $0x78] sm:$0xff]
    %v120 = vld [vmem:[#allocation5 + $0x80] sm:$0xff]
    %v121 = vld [vmem:[#allocation5 + $0x88] sm:$0xff]
    %v122 = vld [vmem:[#allocation5 + $0x90] sm:$0xff]
    %v123 = vld [vmem:[#allocation5 + $0x98] sm:$0xff]
    %v124 = vld [vmem:[#allocation5 + $0xa0] sm:$0xff]
    %v125 = vld [vmem:[#allocation5 + $0xa8] sm:$0xff]
    %v126 = vld [vmem:[#allocation5 + $0xb0] sm:$0xff]
    %v127 = vld [vmem:[#allocation5 + $0xb8] sm:$0xff]
    %v128 = vld [vmem:[#allocation5 + $0xc0] sm:$0xff]
    %v129 = vld [vmem:[#allocation5 + $0xc8] sm:$0xff]
    %v130 = vld [vmem:[#allocation5 + $0xd0] sm:$0xff]
    %v131 = vld [vmem:[#allocation5 + $0xd8] sm:$0xff]
    %v132 = vld [vmem:[#allocation5 + $0xe0] sm:$0xff]
    %v133 = vld [vmem:[#allocation5 + $0xe8] sm:$0xff]
    %v134 = vld [vmem:[#allocation5 + $0xf0] sm:$0xff]
    %v135 = vld [vmem:[#allocation5 + $0xf8] sm:$0xff]
    %v136 = vld [vmem:[#allocation5 + $0x100] sm:$0xff]
    %v137 = vld [vmem:[#allocation5 + $0x108] sm:$0xff]
    %v138 = vld [vmem:[#allocation5 + $0x110] sm:$0xff]
    %v139 = vld [vmem:[#allocation5 + $0x118] sm:$0xff]
    %v140 = vld [vmem:[#allocation5 + $0x120] sm:$0xff]
    %v141 = vld [vmem:[#allocation5 + $0x128] sm:$0xff]
    %v142 = vld [vmem:[#allocation5 + $0x130] sm:$0xff]
    %v143 = vld [vmem:[#allocation5 + $0x138] sm:$0xff]
    %v144 = vld [vmem:[#allocation5 + $0x140] sm:$0xff]
    %v145 = vld [vmem:[#allocation5 + $0x148] sm:$0xff]
    %v146 = vld [vmem:[#allocation5 + $0x150] sm:$0xff]
    %v147 = vld [vmem:[#allocation5 + $0x158] sm:$0xff]
    %v148 = vld [vmem:[#allocation5 + $0x160] sm:$0xff]
    %v149 = vld [vmem:[#allocation5 + $0x168] sm:$0xff]
    %v150 = vld [vmem:[#allocation5 + $0x170] sm:$0xff]
    %v151 = vld [vmem:[#allocation5 + $0x178] sm:$0xff]
    %v152 = vld [vmem:[#allocation5 + $0x180] sm:$0xff]
    %v153 = vld [vmem:[#allocation5 + $0x188] sm:$0xff]
    %v154 = vld [vmem:[#allocation5 + $0x190] sm:$0xff]
    %v155 = vld [vmem:[#allocation5 + $0x198] sm:$0xff]
    %v156 = vld [vmem:[#allocation5 + $0x1a0] sm:$0xff]
    %v157 = vld [vmem:[#allocation5 + $0x1a8] sm:$0xff]
    %v158 = vld [vmem:[#allocation5 + $0x1b0] sm:$0xff]
    %v159 = vld [vmem:[#allocation5 + $0x1b8] sm:$0xff]
    %v160 = vld [vmem:[#allocation5 + $0x1c0] sm:$0xff]
    %v161 = vld [vmem:[#allocation5 + $0x1c8] sm:$0xff]
    %v162 = vld [vmem:[#allocation5 + $0x1d0] sm:$0xff]
    %v163 = vld [vmem:[#allocation5 + $0x1d8] sm:$0xff]
    %v164 = vld [vmem:[#allocation5 + $0x1e0] sm:$0xff]
    %v165 = vld [vmem:[#allocation5 + $0x1e8] sm:$0xff]
    %v166 = vld [vmem:[#allocation5 + $0x1f0] sm:$0xff]
    %v167 = vld [vmem:[#allocation5 + $0x1f8] sm:$0xff]
    %v168 = vld [vmem:[#allocation5 + $0x200] sm:$0xff]
    %v169 = vld [vmem:[#allocation5 + $0x208] sm:$0xff]
    %v170 = vld [vmem:[#allocation5 + $0x210] sm:$0xff]
    %v171 = vld [vmem:[#allocation5 + $0x218] sm:$0xff]
    %v172 = vld [vmem:[#allocation5 + $0x220] sm:$0xff]
    %v173 = vld [vmem:[#allocation5 + $0x228] sm:$0xff]
    %v174 = vld [vmem:[#allocation5 + $0x230] sm:$0xff]
    %v175 = vld [vmem:[#allocation5 + $0x238] sm:$0xff]
    %v176 = vld [vmem:[#allocation5 + $0x240] sm:$0xff]
    %v177 = vld [vmem:[#allocation5 + $0x248] sm:$0xff]
    %v178 = vld [vmem:[#allocation5 + $0x250] sm:$0xff]
    %v179 = vld [vmem:[#allocation5 + $0x258] sm:$0xff]
    %v180 = vld [vmem:[#allocation5 + $0x260] sm:$0xff]
    %v181 = vld [vmem:[#allocation5 + $0x268] sm:$0xff]
    %v182 = vld [vmem:[#allocation5 + $0x270] sm:$0xff]
    %v183 = vld [vmem:[#allocation5 + $0x278] sm:$0xff]
    %v184 = vld [vmem:[#allocation5 + $0x280] sm:$0xff]
    %v185 = vld [vmem:[#allocation5 + $0x288] sm:$0xff]
    %v186 = vld [vmem:[#allocation5 + $0x290] sm:$0xff]
    %v187 = vld [vmem:[#allocation5 + $0x298] sm:$0xff]
    %v188 = vld [vmem:[#allocation5 + $0x2a0] sm:$0xff]
    %v189 = vld [vmem:[#allocation5 + $0x2a8] sm:$0xff]
    %v190 = vld [vmem:[#allocation5 + $0x2b0] sm:$0xff]
    %v191 = vld [vmem:[#allocation5 + $0x2b8] sm:$0xff]
    %v192 = vld [vmem:[#allocation5 + $0x2c0] sm:$0xff]
    %v193 = vld [vmem:[#allocation5 + $0x2c8] sm:$0xff]
    %v194 = vld [vmem:[#allocation5 + $0x2d0] sm:$0xff]
    %v195 = vld [vmem:[#allocation5 + $0x2d8] sm:$0xff]
    %v196 = vld [vmem:[#allocation5 + $0x2e0] sm:$0xff]
    %v197 = vld [vmem:[#allocation5 + $0x2e8] sm:$0xff]
    %v198 = vld [vmem:[#allocation5 + $0x2f0] sm:$0xff]
    %v199 = vld [vmem:[#allocation5 + $0x2f8] sm:$0xff]
    %v200 = vld [vmem:[#allocation5 + $0x300] sm:$0xff]
    %v201 = vld [vmem:[#allocation5 + $0x308] sm:$0xff]
    %v202 = vld [vmem:[#allocation7] sm:$0x3]
    %v204 = vperm.slane %v202, 0
    %v205 = vperm.slane %v202, 1
    %v306 = vunpack.c.l.b16 %v104
    %v307 = vunpack.c.h.b16 %v104
    %v308 = vunpack.c.l.b16 %v105
    %v309 = vunpack.c.h.b16 %v105
    %v310 = vunpack.c.l.b16 %v106
    %v311 = vunpack.c.h.b16 %v106
    %v312 = vunpack.c.l.b16 %v107
    %v313 = vunpack.c.h.b16 %v107
    %v314 = vunpack.c.l.b16 %v108
    %v315 = vunpack.c.h.b16 %v108
    %v316 = vunpack.c.l.b16 %v109
    %v317 = vunpack.c.h.b16 %v109
    %v318 = vunpack.c.l.b16 %v110
    %v319 = vunpack.c.h.b16 %v110
    %v320 = vunpack.c.l.b16 %v111
    %v321 = vunpack.c.h.b16 %v111
    %v322 = vunpack.c.l.b16 %v112
    %v323 = vunpack.c.h.b16 %v112
    %v324 = vunpack.c.l.b16 %v113
    %v325 = vunpack.c.h.b16 %v113
    %v326 = vunpack.c.l.b16 %v114
    %v327 = vunpack.c.h.b16 %v114
    %v328 = vunpack.c.l.b16 %v115
    %v329 = vunpack.c.h.b16 %v115
    %v330 = vunpack.c.l.b16 %v116
    %v331 = vunpack.c.h.b16 %v116
    %v332 = vunpack.c.l.b16 %v117
    %v333 = vunpack.c.h.b16 %v117
    %v334 = vunpack.c.l.b16 %v118
    %v335 = vunpack.c.h.b16 %v118
    %v336 = vunpack.c.l.b16 %v119
    %v337 = vunpack.c.h.b16 %v119
    %v338 = vunpack.c.l.b16 %v120
    %v339 = vunpack.c.h.b16 %v120
    %v340 = vunpack.c.l.b16 %v121
    %v341 = vunpack.c.h.b16 %v121
    %v342 = vunpack.c.l.b16 %v122
    %v343 = vunpack.c.h.b16 %v122
    %v344 = vunpack.c.l.b16 %v123
    %v345 = vunpack.c.h.b16 %v123
    %v346 = vunpack.c.l.b16 %v124
    %v347 = vunpack.c.h.b16 %v124
    %v348 = vunpack.c.l.b16 %v125
    %v349 = vunpack.c.h.b16 %v125
    %v350 = vunpack.c.l.b16 %v126
    %v351 = vunpack.c.h.b16 %v126
    %v352 = vunpack.c.l.b16 %v127
    %v353 = vunpack.c.h.b16 %v127
    %v354 = vunpack.c.l.b16 %v128
    %v355 = vunpack.c.h.b16 %v128
    %v356 = vunpack.c.l.b16 %v129
    %v357 = vunpack.c.h.b16 %v129
    %v358 = vunpack.c.l.b16 %v130
    %v359 = vunpack.c.h.b16 %v130
    %v360 = vunpack.c.l.b16 %v131
    %v361 = vunpack.c.h.b16 %v131
    %v362 = vunpack.c.l.b16 %v132
    %v363 = vunpack.c.h.b16 %v132
    %v364 = vunpack.c.l.b16 %v133
    %v365 = vunpack.c.h.b16 %v133
    %v366 = vunpack.c.l.b16 %v134
    %v367 = vunpack.c.h.b16 %v134
    %v368 = vunpack.c.l.b16 %v135
    %v369 = vunpack.c.h.b16 %v135
    %v370 = vunpack.c.l.b16 %v136
    %v371 = vunpack.c.h.b16 %v136
    %v372 = vunpack.c.l.b16 %v137
    %v373 = vunpack.c.h.b16 %v137
    %v374 = vunpack.c.l.b16 %v138
    %v375 = vunpack.c.h.b16 %v138
    %v376 = vunpack.c.l.b16 %v139
    %v377 = vunpack.c.h.b16 %v139
    %v378 = vunpack.c.l.b16 %v140
    %v379 = vunpack.c.h.b16 %v140
    %v380 = vunpack.c.l.b16 %v141
    %v381 = vunpack.c.h.b16 %v141
    %v382 = vunpack.c.l.b16 %v142
    %v383 = vunpack.c.h.b16 %v142
    %v384 = vunpack.c.l.b16 %v143
    %v385 = vunpack.c.h.b16 %v143
    %v386 = vunpack.c.l.b16 %v144
    %v387 = vunpack.c.h.b16 %v144
    %v388 = vunpack.c.l.b16 %v145
    %v389 = vunpack.c.h.b16 %v145
    %v390 = vunpack.c.l.b16 %v146
    %v391 = vunpack.c.h.b16 %v146
    %v392 = vunpack.c.l.b16 %v147
    %v393 = vunpack.c.h.b16 %v147
    %v394 = vunpack.c.l.b16 %v148
    %v395 = vunpack.c.h.b16 %v148
    %v396 = vunpack.c.l.b16 %v149
    %v397 = vunpack.c.h.b16 %v149
    %v398 = vunpack.c.l.b16 %v150
    %v399 = vunpack.c.h.b16 %v150
    %v400 = vunpack.c.l.b16 %v151
    %v401 = vunpack.c.h.b16 %v151
    %v402 = vunpack.c.l.b16 %v152
    %v403 = vunpack.c.h.b16 %v152
    %v404 = vunpack.c.l.b16 %v153
    %v405 = vunpack.c.h.b16 %v153
    %v406 = vunpack.c.l.b16 %v154
    %v407 = vunpack.c.h.b16 %v154
    %v408 = vunpack.c.l.b16 %v155
    %v409 = vunpack.c.h.b16 %v155
    %v410 = vunpack.c.l.b16 %v156
    %v411 = vunpack.c.h.b16 %v156
    %v412 = vunpack.c.l.b16 %v157
    %v413 = vunpack.c.h.b16 %v157
    %v414 = vunpack.c.l.b16 %v158
    %v415 = vunpack.c.h.b16 %v158
    %v416 = vunpack.c.l.b16 %v159
    %v417 = vunpack.c.h.b16 %v159
    %v418 = vunpack.c.l.b16 %v160
    %v419 = vunpack.c.h.b16 %v160
    %v420 = vunpack.c.l.b16 %v161
    %v421 = vunpack.c.h.b16 %v161
    %v422 = vunpack.c.l.b16 %v162
    %v423 = vunpack.c.h.b16 %v162
    %v424 = vunpack.c.l.b16 %v163
    %v425 = vunpack.c.h.b16 %v163
    %v426 = vunpack.c.l.b16 %v164
    %v427 = vunpack.c.h.b16 %v164
    %v428 = vunpack.c.l.b16 %v165
    %v429 = vunpack.c.h.b16 %v165
    %v430 = vunpack.c.l.b16 %v166
    %v431 = vunpack.c.h.b16 %v166
    %v432 = vunpack.c.l.b16 %v167
    %v433 = vunpack.c.h.b16 %v167
    %v434 = vunpack.c.l.b16 %v168
    %v435 = vunpack.c.h.b16 %v168
    %v436 = vunpack.c.l.b16 %v169
    %v437 = vunpack.c.h.b16 %v169
    %v438 = vunpack.c.l.b16 %v170
    %v439 = vunpack.c.h.b16 %v170
    %v440 = vunpack.c.l.b16 %v171
    %v441 = vunpack.c.h.b16 %v171
    %v442 = vunpack.c.l.b16 %v172
    %v443 = vunpack.c.h.b16 %v172
    %v444 = vunpack.c.l.b16 %v173
    %v445 = vunpack.c.h.b16 %v173
    %v446 = vunpack.c.l.b16 %v174
    %v447 = vunpack.c.h.b16 %v174
    %v448 = vunpack.c.l.b16 %v175
    %v449 = vunpack.c.h.b16 %v175
    %v450 = vunpack.c.l.b16 %v176
    %v451 = vunpack.c.h.b16 %v176
    %v452 = vunpack.c.l.b16 %v177
    %v453 = vunpack.c.h.b16 %v177
    %v454 = vunpack.c.l.b16 %v178
    %v455 = vunpack.c.h.b16 %v178
    %v456 = vunpack.c.l.b16 %v179
    %v457 = vunpack.c.h.b16 %v179
    %v458 = vunpack.c.l.b16 %v180
    %v459 = vunpack.c.h.b16 %v180
    %v460 = vunpack.c.l.b16 %v181
    %v461 = vunpack.c.h.b16 %v181
    %v462 = vunpack.c.l.b16 %v182
    %v463 = vunpack.c.h.b16 %v182
    %v464 = vunpack.c.l.b16 %v183
    %v465 = vunpack.c.h.b16 %v183
    %v466 = vunpack.c.l.b16 %v184
    %v467 = vunpack.c.h.b16 %v184
    %v468 = vunpack.c.l.b16 %v185
    %v469 = vunpack.c.h.b16 %v185
    %v470 = vunpack.c.l.b16 %v186
    %v471 = vunpack.c.h.b16 %v186
    %v472 = vunpack.c.l.b16 %v187
    %v473 = vunpack.c.h.b16 %v187
    %v474 = vunpack.c.l.b16 %v188
    %v475 = vunpack.c.h.b16 %v188
    %v476 = vunpack.c.l.b16 %v189
    %v477 = vunpack.c.h.b16 %v189
    %v478 = vunpack.c.l.b16 %v190
    %v479 = vunpack.c.h.b16 %v190
    %v480 = vunpack.c.l.b16 %v191
    %v481 = vunpack.c.h.b16 %v191
    %v482 = vunpack.c.l.b16 %v192
    %v483 = vunpack.c.h.b16 %v192
    %v484 = vunpack.c.l.b16 %v193
    %v485 = vunpack.c.h.b16 %v193
    %v486 = vunpack.c.l.b16 %v194
    %v487 = vunpack.c.h.b16 %v194
    %v488 = vunpack.c.l.b16 %v195
    %v489 = vunpack.c.h.b16 %v195
    %v490 = vunpack.c.l.b16 %v196
    %v491 = vunpack.c.h.b16 %v196
    %v492 = vunpack.c.l.b16 %v197
    %v493 = vunpack.c.h.b16 %v197
    %v494 = vunpack.c.l.b16 %v198
    %v495 = vunpack.c.h.b16 %v198
    %v496 = vunpack.c.l.b16 %v199
    %v497 = vunpack.c.h.b16 %v199
    %v498 = vunpack.c.l.b16 %v200
    %v499 = vunpack.c.h.b16 %v200
    %v500 = vunpack.c.l.b16 %v201
    %v501 = vunpack.c.h.b16 %v201
    %v502 = vpack.c.b16 %v308, %v306
    %v503 = vpack.c.b16 %v309, %v307
    %v504 = vpack.c.b16 %v312, %v310
    %v505 = vpack.c.b16 %v313, %v311
    %v506 = vpack.c.b16 %v316, %v314
    %v507 = vpack.c.b16 %v317, %v315
    %v508 = vpack.c.b16 %v320, %v318
    %v509 = vpack.c.b16 %v321, %v319
    %v510 = vpack.c.b16 %v324, %v322
    %v511 = vpack.c.b16 %v325, %v323
    %v512 = vpack.c.b16 %v328, %v326
    %v513 = vpack.c.b16 %v329, %v327
    %v514 = vpack.c.b16 %v332, %v330
    %v515 = vpack.c.b16 %v333, %v331
    %v516 = vpack.c.b16 %v336, %v334
    %v517 = vpack.c.b16 %v337, %v335
    %v518 = vpack.c.b16 %v340, %v338
    %v519 = vpack.c.b16 %v341, %v339
    %v520 = vpack.c.b16 %v344, %v342
    %v521 = vpack.c.b16 %v345, %v343
    %v522 = vpack.c.b16 %v348, %v346
    %v523 = vpack.c.b16 %v349, %v347
    %v524 = vpack.c.b16 %v352, %v350
    %v525 = vpack.c.b16 %v353, %v351
    %v526 = vpack.c.b16 %v356, %v354
    %v527 = vpack.c.b16 %v357, %v355
    %v528 = vpack.c.b16 %v360, %v358
    %v529 = vpack.c.b16 %v361, %v359
    %v530 = vpack.c.b16 %v364, %v362
    %v531 = vpack.c.b16 %v365, %v363
    %v532 = vpack.c.b16 %v368, %v366
    %v533 = vpack.c.b16 %v369, %v367
    %v534 = vpack.c.b16 %v372, %v370
    %v535 = vpack.c.b16 %v373, %v371
    %v536 = vpack.c.b16 %v376, %v374
    %v537 = vpack.c.b16 %v377, %v375
    %v538 = vpack.c.b16 %v380, %v378
    %v539 = vpack.c.b16 %v381, %v379
    %v540 = vpack.c.b16 %v384, %v382
    %v541 = vpack.c.b16 %v385, %v383
    %v542 = vpack.c.b16 %v388, %v386
    %v543 = vpack.c.b16 %v389, %v387
    %v544 = vpack.c.b16 %v392, %v390
    %v545 = vpack.c.b16 %v393, %v391
    %v546 = vpack.c.b16 %v396, %v394
    %v547 = vpack.c.b16 %v397, %v395
    %v548 = vpack.c.b16 %v400, %v398
    %v549 = vpack.c.b16 %v401, %v399
    %v550 = vpack.c.b16 %v404, %v402
    %v551 = vpack.c.b16 %v405, %v403
    %v552 = vpack.c.b16 %v408, %v406
    %v553 = vpack.c.b16 %v409, %v407
    %v554 = vpack.c.b16 %v412, %v410
    %v555 = vpack.c.b16 %v413, %v411
    %v556 = vpack.c.b16 %v416, %v414
    %v557 = vpack.c.b16 %v417, %v415
    %v558 = vpack.c.b16 %v420, %v418
    %v559 = vpack.c.b16 %v421, %v419
    %v560 = vpack.c.b16 %v424, %v422
    %v561 = vpack.c.b16 %v425, %v423
    %v562 = vpack.c.b16 %v428, %v426
    %v563 = vpack.c.b16 %v429, %v427
    %v564 = vpack.c.b16 %v432, %v430
    %v565 = vpack.c.b16 %v433, %v431
    %v566 = vpack.c.b16 %v436, %v434
    %v567 = vpack.c.b16 %v437, %v435
    %v568 = vpack.c.b16 %v440, %v438
    %v569 = vpack.c.b16 %v441, %v439
    %v570 = vpack.c.b16 %v444, %v442
    %v571 = vpack.c.b16 %v445, %v443
    %v572 = vpack.c.b16 %v448, %v446
    %v573 = vpack.c.b16 %v449, %v447
    %v574 = vpack.c.b16 %v452, %v450
    %v575 = vpack.c.b16 %v453, %v451
    %v576 = vpack.c.b16 %v456, %v454
    %v577 = vpack.c.b16 %v457, %v455
    %v578 = vpack.c.b16 %v460, %v458
    %v579 = vpack.c.b16 %v461, %v459
    %v580 = vpack.c.b16 %v464, %v462
    %v581 = vpack.c.b16 %v465, %v463
    %v582 = vpack.c.b16 %v468, %v466
    %v583 = vpack.c.b16 %v469, %v467
    %v584 = vpack.c.b16 %v472, %v470
    %v585 = vpack.c.b16 %v473, %v471
    %v586 = vpack.c.b16 %v476, %v474
    %v587 = vpack.c.b16 %v477, %v475
    %v588 = vpack.c.b16 %v480, %v478
    %v589 = vpack.c.b16 %v481, %v479
    %v590 = vpack.c.b16 %v484, %v482
    %v591 = vpack.c.b16 %v485, %v483
    %v592 = vpack.c.b16 %v488, %v486
    %v593 = vpack.c.b16 %v489, %v487
    %v594 = vpack.c.b16 %v492, %v490
    %v595 = vpack.c.b16 %v493, %v491
    %v596 = vpack.c.b16 %v496, %v494
    %v597 = vpack.c.b16 %v497, %v495
    %v598 = vpack.c.b16 %v500, %v498
    %v599 = vpack.c.b16 %v501, %v499
    %vm698 = vcmask 130048
    %v700 = vsel %vm698, %v103, 0
    %702 = vmatpush.bf16.msra.mxu0 %v516
    %703 = vmatpush.bf16.msra.mxu0 %v514
    %704 = vmatpush.bf16.msra.mxu0 %v512
    %705 = vmatpush.bf16.msra.mxu0 %v510
    %706 = vmatpush.bf16.msra.mxu0 %v508
    %707 = vmatpush.bf16.msra.mxu0 %v506
    %708 = vmatpush.bf16.msra.mxu0 %v504
    %709 = vmatpush.bf16.msra.mxu0 %v502
    %710 = vmatmul.bf16.gmra.mxu0 %v97
    %v711 = vpop.f32.mrf.mxu0
    %v712 = vadd.f32 %v204, %v711
    %v713 = vpop.f32.mrf.mxu0
    %v714 = vadd.f32 %v204, %v713
    %715 = vdwg.mxu0
    %716 = vmatpush.bf16.msra.mxu0 %v532
    %717 = vmatpush.bf16.msra.mxu0 %v530
    %718 = vmatpush.bf16.msra.mxu0 %v528
    %719 = vmatpush.bf16.msra.mxu0 %v526
    %720 = vmatpush.bf16.msra.mxu0 %v524
    %721 = vmatpush.bf16.msra.mxu0 %v522
    %722 = vmatpush.bf16.msra.mxu0 %v520
    %723 = vmatpush.bf16.msra.mxu0 %v518
    %724 = vmatmul.bf16.gmra.mxu0 %v98
    %v725 = vpop.f32.mrf.mxu0
    %v726 = vadd.f32 %v712, %v725
    %v727 = vpop.f32.mrf.mxu0
    %v728 = vadd.f32 %v714, %v727
    %729 = vdwg.mxu0
    %730 = vmatpush.bf16.msra.mxu0 %v548
    %731 = vmatpush.bf16.msra.mxu0 %v546
    %732 = vmatpush.bf16.msra.mxu0 %v544
    %733 = vmatpush.bf16.msra.mxu0 %v542
    %734 = vmatpush.bf16.msra.mxu0 %v540
    %735 = vmatpush.bf16.msra.mxu0 %v538
    %736 = vmatpush.bf16.msra.mxu0 %v536
    %737 = vmatpush.bf16.msra.mxu0 %v534
    %738 = vmatmul.bf16.gmra.mxu0 %v99
    %v739 = vpop.f32.mrf.mxu0
    %v740 = vadd.f32 %v726, %v739
    %v741 = vpop.f32.mrf.mxu0
    %v742 = vadd.f32 %v728, %v741
    %743 = vdwg.mxu0
    %744 = vmatpush.bf16.msra.mxu0 %v564
    %745 = vmatpush.bf16.msra.mxu0 %v562
    %746 = vmatpush.bf16.msra.mxu0 %v560
    %747 = vmatpush.bf16.msra.mxu0 %v558
    %748 = vmatpush.bf16.msra.mxu0 %v556
    %749 = vmatpush.bf16.msra.mxu0 %v554
    %750 = vmatpush.bf16.msra.mxu0 %v552
    %751 = vmatpush.bf16.msra.mxu0 %v550
    %752 = vmatmul.bf16.gmra.mxu0 %v100
    %v753 = vpop.f32.mrf.mxu0
    %v754 = vadd.f32 %v740, %v753
    %v755 = vpop.f32.mrf.mxu0
    %v756 = vadd.f32 %v742, %v755
    %757 = vdwg.mxu0
    %758 = vmatpush.bf16.msra.mxu0 %v580
    %759 = vmatpush.bf16.msra.mxu0 %v578
    %760 = vmatpush.bf16.msra.mxu0 %v576
    %761 = vmatpush.bf16.msra.mxu0 %v574
    %762 = vmatpush.bf16.msra.mxu0 %v572
    %763 = vmatpush.bf16.msra.mxu0 %v570
    %764 = vmatpush.bf16.msra.mxu0 %v568
    %765 = vmatpush.bf16.msra.mxu0 %v566
    %766 = vmatmul.bf16.gmra.mxu0 %v101
    %v767 = vpop.f32.mrf.mxu0
    %v768 = vadd.f32 %v754, %v767
    %v769 = vpop.f32.mrf.mxu0
    %v770 = vadd.f32 %v756, %v769
    %771 = vdwg.mxu0
    %772 = vmatpush.bf16.msra.mxu0 %v596
    %773 = vmatpush.bf16.msra.mxu0 %v594
    %774 = vmatpush.bf16.msra.mxu0 %v592
    %775 = vmatpush.bf16.msra.mxu0 %v590
    %776 = vmatpush.bf16.msra.mxu0 %v588
    %777 = vmatpush.bf16.msra.mxu0 %v586
    %778 = vmatpush.bf16.msra.mxu0 %v584
    %779 = vmatpush.bf16.msra.mxu0 %v582
    %780 = vmatmul.bf16.gmra.mxu0 %v102
    %v781 = vpop.f32.mrf.mxu0
    %v782 = vadd.f32 %v768, %v781
    %v783 = vpop.f32.mrf.mxu0
    %v784 = vadd.f32 %v770, %v783
    %785 = vdwg.mxu0
    %786 = vmatpush.bf16.msra.mxu0 0
    %787 = vmatpush.bf16.msra.mxu0 0
    %788 = vmatpush.bf16.msra.mxu0 0
    %789 = vmatpush.bf16.msra.mxu0 0
    %790 = vmatpush.bf16.msra.mxu0 0
    %791 = vmatpush.bf16.msra.mxu0 0
    %792 = vmatpush.bf16.msra.mxu0 0
    %793 = vmatpush.bf16.msra.mxu0 %v598
    %794 = vmatmul.bf16.gmra.mxu0 %v700
    %v795 = vpop.f32.mrf.mxu0
    %v796 = vadd.f32 %v782, %v795
    %v797 = vpop.f32.mrf.mxu0
    %v798 = vadd.f32 %v784, %v797
    %799 = vdwg.mxu0
    %800 = vmatpush.bf16.msra.mxu0 %v517
    %801 = vmatpush.bf16.msra.mxu0 %v515
    %802 = vmatpush.bf16.msra.mxu0 %v513
    %803 = vmatpush.bf16.msra.mxu0 %v511
    %804 = vmatpush.bf16.msra.mxu0 %v509
    %805 = vmatpush.bf16.msra.mxu0 %v507
    %806 = vmatpush.bf16.msra.mxu0 %v505
    %807 = vmatpush.bf16.msra.mxu0 %v503
    %808 = vmatmul.bf16.gmra.mxu0 %v97
    %v809 = vpop.f32.mrf.mxu0
    %v810 = vadd.f32 %v205, %v809
    %v811 = vpop.f32.mrf.mxu0
    %v812 = vadd.f32 %v205, %v811
    %813 = vdwg.mxu0
    %814 = vmatpush.bf16.msra.mxu0 %v533
    %815 = vmatpush.bf16.msra.mxu0 %v531
    %816 = vmatpush.bf16.msra.mxu0 %v529
    %817 = vmatpush.bf16.msra.mxu0 %v527
    %818 = vmatpush.bf16.msra.mxu0 %v525
    %819 = vmatpush.bf16.msra.mxu0 %v523
    %820 = vmatpush.bf16.msra.mxu0 %v521
    %821 = vmatpush.bf16.msra.mxu0 %v519
    %822 = vmatmul.bf16.gmra.mxu0 %v98
    %v823 = vpop.f32.mrf.mxu0
    %v824 = vadd.f32 %v810, %v823
    %v825 = vpop.f32.mrf.mxu0
    %v826 = vadd.f32 %v812, %v825
    %827 = vdwg.mxu0
    %828 = vmatpush.bf16.msra.mxu0 %v549
    %829 = vmatpush.bf16.msra.mxu0 %v547
    %830 = vmatpush.bf16.msra.mxu0 %v545
    %831 = vmatpush.bf16.msra.mxu0 %v543
    %832 = vmatpush.bf16.msra.mxu0 %v541
    %833 = vmatpush.bf16.msra.mxu0 %v539
    %834 = vmatpush.bf16.msra.mxu0 %v537
    %835 = vmatpush.bf16.msra.mxu0 %v535
    %836 = vmatmul.bf16.gmra.mxu0 %v99
    %v837 = vpop.f32.mrf.mxu0
    %v838 = vadd.f32 %v824, %v837
    %v839 = vpop.f32.mrf.mxu0
    %v840 = vadd.f32 %v826, %v839
    %841 = vdwg.mxu0
    %842 = vmatpush.bf16.msra.mxu0 %v565
    %843 = vmatpush.bf16.msra.mxu0 %v563
    %844 = vmatpush.bf16.msra.mxu0 %v561
    %845 = vmatpush.bf16.msra.mxu0 %v559
    %846 = vmatpush.bf16.msra.mxu0 %v557
    %847 = vmatpush.bf16.msra.mxu0 %v555
    %848 = vmatpush.bf16.msra.mxu0 %v553
    %849 = vmatpush.bf16.msra.mxu0 %v551
    %850 = vmatmul.bf16.gmra.mxu0 %v100
    %v851 = vpop.f32.mrf.mxu0
    %v852 = vadd.f32 %v838, %v851
    %v853 = vpop.f32.mrf.mxu0
    %v854 = vadd.f32 %v840, %v853
    %855 = vdwg.mxu0
    %856 = vmatpush.bf16.msra.mxu0 %v581
    %857 = vmatpush.bf16.msra.mxu0 %v579
    %858 = vmatpush.bf16.msra.mxu0 %v577
    %859 = vmatpush.bf16.msra.mxu0 %v575
    %860 = vmatpush.bf16.msra.mxu0 %v573
    %861 = vmatpush.bf16.msra.mxu0 %v571
    %862 = vmatpush.bf16.msra.mxu0 %v569
    %863 = vmatpush.bf16.msra.mxu0 %v567
    %864 = vmatmul.bf16.gmra.mxu0 %v101
    %v865 = vpop.f32.mrf.mxu0
    %v866 = vadd.f32 %v852, %v865
    %v867 = vpop.f32.mrf.mxu0
    %v868 = vadd.f32 %v854, %v867
    %869 = vdwg.mxu0
    %870 = vmatpush.bf16.msra.mxu0 %v597
    %871 = vmatpush.bf16.msra.mxu0 %v595
    %872 = vmatpush.bf16.msra.mxu0 %v593
    %873 = vmatpush.bf16.msra.mxu0 %v591
    %874 = vmatpush.bf16.msra.mxu0 %v589
    %875 = vmatpush.bf16.msra.mxu0 %v587
    %876 = vmatpush.bf16.msra.mxu0 %v585
    %877 = vmatpush.bf16.msra.mxu0 %v583
    %878 = vmatmul.bf16.gmra.mxu0 %v102
    %v879 = vpop.f32.mrf.mxu0
    %v880 = vadd.f32 %v866, %v879
    %v881 = vpop.f32.mrf.mxu0
    %v882 = vadd.f32 %v868, %v881
    %883 = vdwg.mxu0
    %884 = vmatpush.bf16.msra.mxu0 0
    %885 = vmatpush.bf16.msra.mxu0 0
    %886 = vmatpush.bf16.msra.mxu0 0
    %887 = vmatpush.bf16.msra.mxu0 0
    %888 = vmatpush.bf16.msra.mxu0 0
    %889 = vmatpush.bf16.msra.mxu0 0
    %890 = vmatpush.bf16.msra.mxu0 0
    %891 = vmatpush.bf16.msra.mxu0 %v599
    %892 = vmatmul.bf16.gmra.mxu0 %v700
    %v893 = vpop.f32.mrf.mxu0
    %v894 = vadd.f32 %v880, %v893
    %v895 = vpop.f32.mrf.mxu0
    %v896 = vadd.f32 %v882, %v895
    %897 = vdwg.mxu0
    %v898 = vmax.f32 %v796, 0.0
    %v899 = vmax.f32 %v894, 0.0
    %v900 = vmax.f32 %v798, 0.0
    %v901 = vmax.f32 %v896, 0.0
    %v902 = vpack.c.bf16 %v900, %v898
    %v903 = vpack.c.bf16 %v901, %v899
    %v904 = vld [vmem:[#allocation8] sm:$0xf]
    %v905 = vld [vmem:[#allocation8 + $0x4] sm:$0xf]
    %v906 = vld [vmem:[#allocation8 + $0x8] sm:$0xf]
    %v907 = vld [vmem:[#allocation8 + $0xc] sm:$0xf]
    %v908 = vld [vmem:[#allocation8 + $0x10] sm:$0xf]
    %v909 = vld [vmem:[#allocation8 + $0x14] sm:$0xf]
    %v910 = vld [vmem:[#allocation8 + $0x18] sm:$0xf]
    %v911 = vld [vmem:[#allocation8 + $0x1c] sm:$0xf]
    %v912 = vld [vmem:[#allocation8 + $0x20] sm:$0xf]
    %v913 = vld [vmem:[#allocation8 + $0x24] sm:$0xf]
    %v914 = vld [vmem:[#allocation8 + $0x28] sm:$0xf]
    %v915 = vld [vmem:[#allocation8 + $0x2c] sm:$0xf]
    %v916 = vld [vmem:[#allocation8 + $0x30] sm:$0xf]
    %v917 = vld [vmem:[#allocation8 + $0x34] sm:$0xf]
    %v918 = vld [vmem:[#allocation8 + $0x38] sm:$0xf]
    %v919 = vld [vmem:[#allocation8 + $0x3c] sm:$0xf]
    %v920 = vld [vmem:[#allocation8 + $0x40] sm:$0xf]
    %v921 = vld [vmem:[#allocation8 + $0x44] sm:$0xf]
    %v922 = vld [vmem:[#allocation8 + $0x48] sm:$0xf]
    %v923 = vld [vmem:[#allocation8 + $0x4c] sm:$0xf]
    %v924 = vld [vmem:[#allocation8 + $0x50] sm:$0xf]
    %v925 = vld [vmem:[#allocation8 + $0x54] sm:$0xf]
    %v926 = vld [vmem:[#allocation8 + $0x58] sm:$0xf]
    %v927 = vld [vmem:[#allocation8 + $0x5c] sm:$0xf]
    %v928 = vld [vmem:[#allocation8 + $0x60] sm:$0xf]
    %v929 = vld [vmem:[#allocation8 + $0x64] sm:$0xf]
    %v930 = vld [vmem:[#allocation8 + $0x68] sm:$0xf]
    %v931 = vld [vmem:[#allocation8 + $0x6c] sm:$0xf]
    %v932 = vld [vmem:[#allocation8 + $0x70] sm:$0xf]
    %v933 = vld [vmem:[#allocation8 + $0x74] sm:$0xf]
    %v934 = vld [vmem:[#allocation8 + $0x78] sm:$0xf]
    %v935 = vld [vmem:[#allocation8 + $0x7c] sm:$0xf]
    %v936 = vld [vmem:[%s4] sm:$0x1]
    %v938 = vperm.slane %v936, 0
    %v972 = vunpack.c.l.b16 %v904
    %v973 = vunpack.c.l.b16 %v905
    %v974 = vunpack.c.l.b16 %v906
    %v975 = vunpack.c.l.b16 %v907
    %v976 = vunpack.c.l.b16 %v908
    %v977 = vunpack.c.l.b16 %v909
    %v978 = vunpack.c.l.b16 %v910
    %v979 = vunpack.c.l.b16 %v911
    %v980 = vunpack.c.l.b16 %v912
    %v981 = vunpack.c.l.b16 %v913
    %v982 = vunpack.c.l.b16 %v914
    %v983 = vunpack.c.l.b16 %v915
    %v984 = vunpack.c.l.b16 %v916
    %v985 = vunpack.c.l.b16 %v917
    %v986 = vunpack.c.l.b16 %v918
    %v987 = vunpack.c.l.b16 %v919
    %v988 = vunpack.c.l.b16 %v920
    %v989 = vunpack.c.l.b16 %v921
    %v990 = vunpack.c.l.b16 %v922
    %v991 = vunpack.c.l.b16 %v923
    %v992 = vunpack.c.l.b16 %v924
    %v993 = vunpack.c.l.b16 %v925
    %v994 = vunpack.c.l.b16 %v926
    %v995 = vunpack.c.l.b16 %v927
    %v996 = vunpack.c.l.b16 %v928
    %v997 = vunpack.c.l.b16 %v929
    %v998 = vunpack.c.l.b16 %v930
    %v999 = vunpack.c.l.b16 %v931
    %v1000 = vunpack.c.l.b16 %v932
    %v1001 = vunpack.c.l.b16 %v933
    %v1002 = vunpack.c.l.b16 %v934
    %v1003 = vunpack.c.l.b16 %v935
    %v1004 = vpack.c.b16 %v973, %v972
    %v1005 = vpack.c.b16 %v975, %v974
    %v1006 = vpack.c.b16 %v977, %v976
    %v1007 = vpack.c.b16 %v979, %v978
    %v1008 = vpack.c.b16 %v981, %v980
    %v1009 = vpack.c.b16 %v983, %v982
    %v1010 = vpack.c.b16 %v985, %v984
    %v1011 = vpack.c.b16 %v987, %v986
    %v1012 = vpack.c.b16 %v989, %v988
    %v1013 = vpack.c.b16 %v991, %v990
    %v1014 = vpack.c.b16 %v993, %v992
    %v1015 = vpack.c.b16 %v995, %v994
    %v1016 = vpack.c.b16 %v997, %v996
    %v1017 = vpack.c.b16 %v999, %v998
    %v1018 = vpack.c.b16 %v1001, %v1000
    %v1019 = vpack.c.b16 %v1003, %v1002
    %1036 = vmatpush.bf16.msra.mxu0 %v1011
    %1037 = vmatpush.bf16.msra.mxu0 %v1010
    %1038 = vmatpush.bf16.msra.mxu0 %v1009
    %1039 = vmatpush.bf16.msra.mxu0 %v1008
    %1040 = vmatpush.bf16.msra.mxu0 %v1007
    %1041 = vmatpush.bf16.msra.mxu0 %v1006
    %1042 = vmatpush.bf16.msra.mxu0 %v1005
    %1043 = vmatpush.bf16.msra.mxu0 %v1004
    %1044 = vmatmul.bf16.gmra.mxu0 %v902
    %v1045 = vpop.f32.mrf.mxu0
    %v1046 = vadd.f32 %v938, %v1045
    %v1047 = vpop.f32.mrf.mxu0
    %v1048 = vadd.f32 %v938, %v1047
    %1049 = vdwg.mxu0
    %1050 = vmatpush.bf16.msra.mxu0 %v1019
    %1051 = vmatpush.bf16.msra.mxu0 %v1018
    %1052 = vmatpush.bf16.msra.mxu0 %v1017
    %1053 = vmatpush.bf16.msra.mxu0 %v1016
    %1054 = vmatpush.bf16.msra.mxu0 %v1015
    %1055 = vmatpush.bf16.msra.mxu0 %v1014
    %1056 = vmatpush.bf16.msra.mxu0 %v1013
    %1057 = vmatpush.bf16.msra.mxu0 %v1012
    %1058 = vmatmul.bf16.gmra.mxu0 %v903
    %v1059 = vpop.f32.mrf.mxu0
    %v1060 = vadd.f32 %v1046, %v1059
    %v1061 = vpop.f32.mrf.mxu0
    %v1062 = vadd.f32 %v1048, %v1061
    %1063 = vdwg.mxu0
    %1064 = vst [vmem:[#allocation10] sm:$0xff] %v1060
    %1065 = vst [vmem:[#allocation10 + $0x8] sm:$0xff] %v1062
    // Predicated region
    $region38: #{tpu_custom_call.1} parent=1 // pred_check
      _
    $region39: #{tpu_custom_call.1} parent=1 // pred_check_branch
      %1067 = sbr.rel (0) target = $region41
    $region40: #{tpu_custom_call.1} parent=1 // pred_region
      %1069 = vsyncadd [#allocation4], 0
      %s1070 = sshll.u32 [#allocation10], 4
      %s1071 = int_to_ptr.vmem [resolvable:$true] %s1070
      %s1072 = sshll.u32 %s5, 4
      %s1073 = int_to_ptr.hbm [resolvable:$true] %s1072
      %1078 = dma.vmem_to_hbm [thread:$0]  %s1071, 256, %s1073, [#allocation4], 128, 128, 8
    $region41: #{tpu_custom_call.1} parent=1 // pred_fallthru
      _
    // Predicated region
    $region42: #{tpu_custom_call.1} parent=1 // pred_check
      _
    $region43: #{tpu_custom_call.1} parent=1 // pred_check_branch
      %1080 = sbr.rel (0) target = $region45
    $region44: #{tpu_custom_call.1} parent=1 // pred_region
      %1082 = dma.done [#allocation4], 256
    $region45: #{tpu_custom_call.1} parent=1 // pred_fallthru
      _
    %1083 = vsyncpa [#allocation3], 1
    %1084 = vsyncpa [#allocation6], 1
    %1085 = vsyncpa [#allocation9], 1
    %1086 = vsyncpa [#allocation4], 1

</llo_original>
